<compile_context>
chip_gen: v7x
topology: tpu7x:2x2x1
jax: 0.10.0
libtpu: 0.0.40
codegen_flags: <defaults>
</compile_context>

<pallas_src>
import jax
import jax.numpy as jnp
from jax.experimental import pallas as pl
from jax.experimental.pallas import tpu as pltpu

_LANE = 128
_SUBLANE = 8


def _cdiv(a, b):
    return (a + b - 1) // b


def _round_up(x, m):
    return _cdiv(x, m) * m


def _fused_two_layer_kernel(x_ref, w0_ref, s0_ref, w1_ref, s1_ref, o_ref):
    """Fused forward: (masked linear + BN + ReLU) -> (linear + BN + ReLU).

    x_ref:  (TB, K)       batch tile of activations (compute dtype)
    w0_ref: (K,  N0p)     layer-0 weight, mask & BN scale folded, (in, out) layout
    s0_ref: (1,  N0p)     layer-0 folded shift (= bias*scale + BN shift), f32
    w1_ref: (N0p, N1)     layer-1 weight, BN scale folded, (in, out) layout
    s1_ref: (1,  N1)      layer-1 folded shift, f32
    o_ref:  (TB, N1)      output tile (unpadded feature dim), f32
    """
    # Layer 0: MaskedLinear + BatchNorm(eval) + ReLU (mask/BN/bias folded in).
    h = jnp.dot(x_ref[...], w0_ref[...], preferred_element_type=jnp.float32)
    h = jnp.maximum(h + s0_ref[...], 0.0)
    # Layer 1: Linear + BatchNorm(eval) + ReLU (folded). Cast activations back
    # to the weight dtype so the MXU uses its native (bf16) path; acc stays f32.
    y = jnp.dot(h.astype(w1_ref.dtype), w1_ref[...],
                preferred_element_type=jnp.float32)
    y = jnp.maximum(y + s1_ref[...], 0.0)
    o_ref[...] = y.astype(o_ref.dtype)
    # Dropout: identity in eval mode (no-op).
    # TODO(synk): training-mode BatchNorm (batch statistics) and dropout masks
    # are not implemented; this kernel matches eval/inference semantics.


def _fold_bn(gamma, beta, running_mean, running_var, eps=0.001):
    scale = gamma / jnp.sqrt(running_var + eps)
    shift = beta - running_mean * scale
    return scale, shift


def masked_linear_layers_forward(x, params, *, batch_tile=4096,
                                 compute_dtype=jnp.bfloat16, max_tile=8192):
    """MaskedLinearLayers.forward (eval mode), mask_first=True, no covariates."""
    B, K = x.shape
    N0 = params["w0"].shape[0]
    N1 = params["w1"].shape[0]

    # --- host-side glue: fold mask + eval-BN + bias into weights / shifts ---
    sc0, sh0 = _fold_bn(params["bn0_gamma"], params["bn0_beta"],
                        params["bn0_rm"], params["bn0_rv"])
    sc1, sh1 = _fold_bn(params["bn1_gamma"], params["bn1_beta"],
                        params["bn1_rm"], params["bn1_rv"])
    w0_eff = (params["w0"] * params["mask"] * sc0[:, None]).T        # (K, N0)
    s0_eff = params["b0"] * sc0 + sh0                                # (N0,)
    w1_eff = (params["w1"] * sc1[:, None]).T                         # (N0, N1)
    s1_eff = params["b1"] * sc1 + sh1                                # (N1,)

    # --- pad hidden dim to 128 lanes (lane-dense intermediate); output stays
    #     UNPADDED at N1 to avoid 8x-inflated writeback ---
    N0p = _round_up(N0, _LANE)
    w0_p = jnp.zeros((K, N0p), compute_dtype).at[:, :N0].set(
        w0_eff.astype(compute_dtype))
    s0_p = jnp.zeros((1, N0p), jnp.float32).at[:, :N0].set(
        s0_eff[None, :].astype(jnp.float32))
    w1_p = jnp.zeros((N0p, N1), compute_dtype).at[:N0, :].set(
        w1_eff.astype(compute_dtype))
    s1_p = s1_eff[None, :].astype(jnp.float32)

    # --- batch tiling: large tiles (amortize ~0.35us/step), >=2 steps for the
    #     two v7x TensorCores when B is large, minimal pad waste ---
    n_tiles = _cdiv(B, batch_tile)
    if B >= 1024:
        n_tiles = max(n_tiles, 2)
    tb = min(_round_up(_cdiv(B, n_tiles), _SUBLANE), max_tile)
    n_tiles = _cdiv(B, tb)
    Bp = n_tiles * tb

    x_p = x.astype(compute_dtype)
    if Bp != B:
        x_p = jnp.zeros((Bp, K), compute_dtype).at[:B, :].set(x_p)

    x_bytes = jnp.dtype(compute_dtype).itemsize
    out_bytes = 4
    weight_bytes = (K * N0p + N0p * N1) * x_bytes + (N0p + N1) * 4
    vmem_need = (2 * tb * K * x_bytes        # x tile, double-buffered
                 + 2 * tb * N1 * out_bytes   # out tile, double-buffered
                 + tb * N0p * 4              # f32 intermediate h
                 + weight_bytes)
    vmem_limit = int(min(100 * 2**20, max(32 * 2**20, 2 * vmem_need)))

    flops = 2 * Bp * (K * N0p + N0p * N1)
    bytes_accessed = Bp * K * x_bytes + Bp * N1 * out_bytes + weight_bytes

    out = pl.pallas_call(
        _fused_two_layer_kernel,
        out_shape=jax.ShapeDtypeStruct((Bp, N1), jnp.float32),
        grid=(n_tiles,),
        in_specs=[
            pl.BlockSpec((tb, K), lambda i: (i, 0)),      # x batch tile
            pl.BlockSpec((K, N0p), lambda i: (0, 0)),     # folded layer-0 weight
            pl.BlockSpec((1, N0p), lambda i: (0, 0)),     # folded layer-0 shift
            pl.BlockSpec((N0p, N1), lambda i: (0, 0)),    # folded layer-1 weight
            pl.BlockSpec((1, N1), lambda i: (0, 0)),      # folded layer-1 shift
        ],
        out_specs=pl.BlockSpec((tb, N1), lambda i: (i, 0)),
        compiler_params=pltpu.CompilerParams(
            dimension_semantics=("parallel",),
            vmem_limit_bytes=vmem_limit),
        cost_estimate=pl.CostEstimate(flops=flops, transcendentals=0,
                                      bytes_accessed=bytes_accessed),
    )(x_p, w0_p, s0_p, w1_p, s1_p)

    return out if Bp == B else out[:B]


def reference_forward(x, params):
    """Pure-JAX reference mirroring the PyTorch eval-mode forward."""
    eps = 0.001
    w0 = params["w0"] * params["mask"]
    h = x @ w0.T + params["b0"]
    h = (h - params["bn0_rm"]) / jnp.sqrt(params["bn0_rv"] + eps)
    h = h * params["bn0_gamma"] + params["bn0_beta"]
    h = jnp.maximum(h, 0.0)
    o = h @ params["w1"].T + params["b1"]
    o = (o - params["bn1_rm"]) / jnp.sqrt(params["bn1_rv"] + eps)
    o = o * params["bn1_gamma"] + params["bn1_beta"]
    return jnp.maximum(o, 0.0)


if __name__ == "__main__":
    B, n_in, h_mask, n_out = 8, 32, 64, 16

    key = jax.random.PRNGKey(0)
    keys = jax.random.split(key, 12)

    # Deterministic synthetic parameters (shapes follow the module __init__).
    mask = (jax.random.uniform(keys[0], (h_mask, n_in)) > 0.5).astype(jnp.float32)
    params = {
        "mask": mask,
        # Layer 0: MaskedLinear(n_in -> h_mask) + BatchNorm1d(h_mask)
        "w0": jax.random.normal(keys[1], (h_mask, n_in), jnp.float32) * 0.1,
        "b0": jax.random.normal(keys[2], (h_mask,), jnp.float32) * 0.1,
        "bn0_gamma": 1.0 + 0.1 * jax.random.normal(keys[3], (h_mask,), jnp.float32),
        "bn0_beta": 0.1 * jax.random.normal(keys[4], (h_mask,), jnp.float32),
        "bn0_rm": 0.1 * jax.random.normal(keys[5], (h_mask,), jnp.float32),
        "bn0_rv": 1.0 + 0.5 * jax.random.uniform(keys[6], (h_mask,), jnp.float32),
        # Layer 1: Linear(h_mask -> n_out) + BatchNorm1d(n_out)
        "w1": jax.random.normal(keys[7], (n_out, h_mask), jnp.float32) * 0.1,
        "b1": jax.random.normal(keys[8], (n_out,), jnp.float32) * 0.1,
        "bn1_gamma": 1.0 + 0.1 * jax.random.normal(keys[9], (n_out,), jnp.float32),
        "bn1_beta": 0.1 * jax.random.normal(keys[10], (n_out,), jnp.float32),
        "bn1_rm": jnp.zeros((n_out,), jnp.float32),
        "bn1_rv": jnp.ones((n_out,), jnp.float32),
    }

    x = jax.random.normal(jax.random.PRNGKey(42), (B, n_in), jnp.float32)
    ref = reference_forward(x, params)

    # Exact-math path (f32 operands): tight correctness check of the kernel.
    out_f32 = masked_linear_layers_forward(x, params, compute_dtype=jnp.float32)
    out_f32 = jax.block_until_ready(out_f32)
    assert out_f32.shape == (B, n_out), out_f32.shape
    assert jnp.allclose(out_f32, ref, atol=1e-3, rtol=1e-3), (
        float(jnp.max(jnp.abs(out_f32 - ref))))

    # Fast path (bf16 operands, f32 accumulation/epilogue): looser tolerance.
    out_bf16 = masked_linear_layers_forward(x, params, compute_dtype=jnp.bfloat16)
    out_bf16 = jax.block_until_ready(out_bf16)
    assert out_bf16.shape == (B, n_out), out_bf16.shape
    assert jnp.allclose(out_bf16, ref, atol=1e-1, rtol=1e-1), (
        float(jnp.max(jnp.abs(out_bf16 - ref))))

    print("KERNEL_OK")
</pallas_src>

<mosaic_0001>
module attributes {stable_mosaic.version = 11 : i64} {
  func.func @_fused_two_layer_kernel(%arg0: i32, %arg1: memref<8x32xf32, #tpu.memory_space<vmem>>, %arg2: memref<32x128xf32, #tpu.memory_space<vmem>>, %arg3: memref<1x128xf32, #tpu.memory_space<vmem>>, %arg4: memref<128x16xf32, #tpu.memory_space<vmem>>, %arg5: memref<1x16xf32, #tpu.memory_space<vmem>>, %arg6: memref<8x16xf32, #tpu.memory_space<vmem>>) attributes {dimension_semantics = [#tpu.dimension_semantics<parallel>], iteration_bounds = array<i64: 1>, scalar_prefetch = 0 : i64, scratch_operands = 0 : i64, tpu.core_type = #tpu.core_type<tc>, window_params = [{transform_indices = @transform_0, window_bounds = array<i64: 8, 32>}, {pipeline_mode = #tpu.pipeline_mode<synchronous>, transform_indices = @transform_1, window_bounds = array<i64: 32, 128>}, {pipeline_mode = #tpu.pipeline_mode<synchronous>, transform_indices = @transform_2, window_bounds = array<i64: 1, 128>}, {pipeline_mode = #tpu.pipeline_mode<synchronous>, transform_indices = @transform_3, window_bounds = array<i64: 128, 16>}, {pipeline_mode = #tpu.pipeline_mode<synchronous>, transform_indices = @transform_4, window_bounds = array<i64: 1, 16>}, {transform_indices = @transform_5, window_bounds = array<i64: 8, 16>}]} {
    %c0 = arith.constant 0 : index
    %c0_0 = arith.constant 0 : index
    %0 = vector.load %arg1[%c0, %c0_0] : memref<8x32xf32, #tpu.memory_space<vmem>>, vector<8x32xf32>
    %c0_1 = arith.constant 0 : index
    %c0_2 = arith.constant 0 : index
    %1 = vector.load %arg2[%c0_1, %c0_2] : memref<32x128xf32, #tpu.memory_space<vmem>>, vector<32x128xf32>
    %cst = arith.constant dense<0.000000e+00> : vector<8x128xf32>
    %2 = tpu.matmul %0, %1, %cst {dimension_numbers = #tpu.dot_dimension_numbers<[1], [0], [0], [1], [0, 0, 1, 1], [], []>} : vector<8x32xf32>, vector<32x128xf32>, vector<8x128xf32> -> vector<8x128xf32>
    %c0_3 = arith.constant 0 : index
    %c0_4 = arith.constant 0 : index
    %3 = vector.load %arg3[%c0_3, %c0_4] : memref<1x128xf32, #tpu.memory_space<vmem>>, vector<1x128xf32>
    %4 = vector.broadcast %3 : vector<1x128xf32> to vector<8x128xf32>
    %5 = arith.addf %2, %4 : vector<8x128xf32>
    %cst_5 = arith.constant 0.000000e+00 : f32
    %6 = vector.broadcast %cst_5 : f32 to vector<8x128xf32>
    %7 = arith.maximumf %5, %6 : vector<8x128xf32>
    %c0_6 = arith.constant 0 : index
    %c0_7 = arith.constant 0 : index
    %8 = vector.load %arg4[%c0_6, %c0_7] : memref<128x16xf32, #tpu.memory_space<vmem>>, vector<128x16xf32>
    %cst_8 = arith.constant dense<0.000000e+00> : vector<8x16xf32>
    %9 = tpu.matmul %7, %8, %cst_8 {dimension_numbers = #tpu.dot_dimension_numbers<[1], [0], [0], [1], [0, 0, 1, 1], [], []>} : vector<8x128xf32>, vector<128x16xf32>, vector<8x16xf32> -> vector<8x16xf32>
    %c0_9 = arith.constant 0 : index
    %c0_10 = arith.constant 0 : index
    %10 = vector.load %arg5[%c0_9, %c0_10] : memref<1x16xf32, #tpu.memory_space<vmem>>, vector<1x16xf32>
    %11 = vector.broadcast %10 : vector<1x16xf32> to vector<8x16xf32>
    %12 = arith.addf %9, %11 : vector<8x16xf32>
    %cst_11 = arith.constant 0.000000e+00 : f32
    %13 = vector.broadcast %cst_11 : f32 to vector<8x16xf32>
    %14 = arith.maximumf %12, %13 : vector<8x16xf32>
    %c0_12 = arith.constant 0 : index
    %c0_13 = arith.constant 0 : index
    %15 = vector.load %arg6[%c0_12, %c0_13] : memref<8x16xf32, #tpu.memory_space<vmem>>, vector<8x16xf32>
    tpu.vector_store %arg6[%c0_12, %c0_13], %14 {strides = array<i32>} : memref<8x16xf32, #tpu.memory_space<vmem>>, vector<8x16xf32>,
    return
  }
  func.func @transform_0(%arg0: i32) -> (i32, i32) {
    %c0_i32 = arith.constant 0 : i32
    %c0_i32_0 = arith.constant 0 : i32
    return %arg0, %c0_i32 : i32, i32
  }
  func.func @transform_1(%arg0: i32) -> (i32, i32) {
    %c0_i32 = arith.constant 0 : i32
    %c0_i32_0 = arith.constant 0 : i32
    %c0_i32_1 = arith.constant 0 : i32
    return %c0_i32, %c0_i32_0 : i32, i32
  }
  func.func @transform_2(%arg0: i32) -> (i32, i32) {
    %c0_i32 = arith.constant 0 : i32
    %c0_i32_0 = arith.constant 0 : i32
    %c0_i32_1 = arith.constant 0 : i32
    return %c0_i32, %c0_i32_0 : i32, i32
  }
  func.func @transform_3(%arg0: i32) -> (i32, i32) {
    %c0_i32 = arith.constant 0 : i32
    %c0_i32_0 = arith.constant 0 : i32
    %c0_i32_1 = arith.constant 0 : i32
    return %c0_i32, %c0_i32_0 : i32, i32
  }
  func.func @transform_4(%arg0: i32) -> (i32, i32) {
    %c0_i32 = arith.constant 0 : i32
    %c0_i32_0 = arith.constant 0 : i32
    %c0_i32_1 = arith.constant 0 : i32
    return %c0_i32, %c0_i32_0 : i32, i32
  }
  func.func @transform_5(%arg0: i32) -> (i32, i32) {
    %c0_i32 = arith.constant 0 : i32
    %c0_i32_0 = arith.constant 0 : i32
    return %arg0, %c0_i32 : i32, i32
  }
}

</mosaic_0001>

<llo_original>
// kernel: tpu_custom_call.1
$region0: #{tpu_custom_call.1}
  #allocation0 [shape = 'u32[]', space=smem, size = 0x4, offset = 0x4, fixed_abs, tag = 'smem constant byte address 0x4 - core index']
  #allocation1 [shape = 'u32[144,128]{1,0:T(1,128)}', space=vmem, size = 0x12000, scoped, tag = 'internal scratch']
  %s0 = inlined_call_operand.vmem [shape: f32[8,32], index: 0, kind: input, shape index: {}]
  %s1 = inlined_call_operand.vmem [shape: f32[32,128], index: 1, kind: input, shape index: {}]
  %s2 = inlined_call_operand.vmem [shape: f32[1,128], index: 2, kind: input, shape index: {}]
  %s3 = inlined_call_operand.vmem [shape: f32[128,16], index: 3, kind: input, shape index: {}]
  %s4 = inlined_call_operand.vmem [shape: f32[1,16], index: 4, kind: input, shape index: {}]
  %s5 = inlined_call_operand.hbm [shape: f32[8,16], index: 5, kind: output, shape index: {}]
  %s6 = sld [smem:[#allocation0]]
  $region30: #{tpu_custom_call.1} parent=0
    _
  %s8 = ssub.s32 1, %s6
  %s9 = scalar_select 0, %s8, %s6
  $region1: #{tpu_custom_call.1} parent=0
    #allocation2 [shape = 'u8[4096]{0}', space=vmem, size = 0x1000, scoped, tag = 'output window, operand 0, single buffered']
    #allocation3 [shape = 's32[1]{0}', space=sflag, size = 0x4, scoped, tag = 'scoped memory for tpu_custom_call.1']
    %10 = vsyncpa [#allocation3], 0
    // Predicated region
    $region2: #{tpu_custom_call.1} parent=1 // pred_check
      _
    $region3: #{tpu_custom_call.1} parent=1 // pred_check_branch
      %12 = sbr.rel (0) target = $region5
    $region4: #{tpu_custom_call.1} parent=1 // pred_region
      _
    $region5: #{tpu_custom_call.1} parent=1 // pred_fallthru
      _
    // Predicated region
    $region6: #{tpu_custom_call.1} parent=1 // pred_check
      _
    $region7: #{tpu_custom_call.1} parent=1 // pred_check_branch
      %14 = sbr.rel (0) target = $region9
    $region8: #{tpu_custom_call.1} parent=1 // pred_region
      _
    $region9: #{tpu_custom_call.1} parent=1 // pred_fallthru
      _
    // Predicated region
    $region10: #{tpu_custom_call.1} parent=1 // pred_check
      _
    $region11: #{tpu_custom_call.1} parent=1 // pred_check_branch
      %16 = sbr.rel (0) target = $region13
    $region12: #{tpu_custom_call.1} parent=1 // pred_region
      _
    $region13: #{tpu_custom_call.1} parent=1 // pred_fallthru
      _
    // Predicated region
    $region14: #{tpu_custom_call.1} parent=1 // pred_check
      _
    $region15: #{tpu_custom_call.1} parent=1 // pred_check_branch
      %18 = sbr.rel (0) target = $region17
    $region16: #{tpu_custom_call.1} parent=1 // pred_region
      _
    $region17: #{tpu_custom_call.1} parent=1 // pred_fallthru
      _
    // Predicated region
    $region18: #{tpu_custom_call.1} parent=1 // pred_check
      _
    $region19: #{tpu_custom_call.1} parent=1 // pred_check_branch
      %20 = sbr.rel (0) target = $region21
    $region20: #{tpu_custom_call.1} parent=1 // pred_region
      _
    $region21: #{tpu_custom_call.1} parent=1 // pred_fallthru
      _
    %v21 = vld [vmem:[%s0] sm:$0xff]
    %v22 = vld [vmem:[%s1] sm:$0xff]
    %v23 = vld [vmem:[%s1 + $0x8] sm:$0xff]
    %v24 = vld [vmem:[%s1 + $0x10] sm:$0xff]
    %v25 = vld [vmem:[%s1 + $0x18] sm:$0xff]
    %v26 = vld [vmem:[%s2] sm:$0x1]
    %v28 = vlaneseq
    %v29 = vshrl.u32 %v28, 7
    %v30 = vsub.s32 0, %v29
    %v31 = vrot.slane %v26, %v30
    %vm33 = vcmask 261120
    %v35 = vsel %vm33, %v21, 0
    %37 = vmatprep.subr.mxu0 0.0
    %38 = vmatpush1.msra.mxu0 %v22
    %39 = vmatprep.subr.mxu0 0.0
    %40 = vmatpush1.msra.mxu0 %v23
    %41 = vmatprep.subr.mxu0 0.0
    %42 = vmatpush1.msra.mxu0 %v24
    %43 = vmatprep.subr.mxu0 0.0
    %44 = vmatpush1.msra.mxu0 %v25
    %45 = vmatprep.subr.mxu0 0.0
    %46 = vmatpush1.msra.mxu0 0.0
    %47 = vmatprep.subr.mxu0 0.0
    %48 = vmatpush1.msra.mxu0 0.0
    %49 = vmatprep.subr.mxu0 0.0
    %50 = vmatpush1.msra.mxu0 0.0
    %51 = vmatprep.subr.mxu0 0.0
    %52 = vmatpush1.msra.mxu0 0.0
    %53 = vmatprep.subr.mxu0 0.0
    %54 = vmatpush1.msra.mxu0 0.0
    %55 = vmatprep.subr.mxu0 0.0
    %56 = vmatpush1.msra.mxu0 0.0
    %57 = vmatprep.subr.mxu0 0.0
    %58 = vmatpush1.msra.mxu0 0.0
    %59 = vmatprep.subr.mxu0 0.0
    %60 = vmatpush1.msra.mxu0 0.0
    %61 = vmatprep.subr.mxu0 0.0
    %62 = vmatpush1.msra.mxu0 0.0
    %63 = vmatprep.subr.mxu0 0.0
    %64 = vmatpush1.msra.mxu0 0.0
    %65 = vmatprep.subr.mxu0 0.0
    %66 = vmatpush1.msra.mxu0 0.0
    %67 = vmatprep.subr.mxu0 0.0
    %68 = vmatpush1.msra.mxu0 0.0
    %69 = vmatprep.subr.mxu0 0.0
    %70 = vmatpush1.msra.mxu0 0.0
    %71 = vmatprep.subr.mxu0 0.0
    %72 = vmatpush1.msra.mxu0 0.0
    %73 = vmatprep.subr.mxu0 0.0
    %74 = vmatpush1.msra.mxu0 0.0
    %75 = vmatprep.subr.mxu0 0.0
    %76 = vmatpush1.msra.mxu0 0.0
    %77 = vmatprep.subr.mxu0 0.0
    %78 = vmatpush1.msra.mxu0 0.0
    %79 = vmatprep.subr.mxu0 0.0
    %80 = vmatpush1.msra.mxu0 0.0
    %81 = vmatprep.subr.mxu0 0.0
    %82 = vmatpush1.msra.mxu0 0.0
    %83 = vmatprep.subr.mxu0 0.0
    %84 = vmatpush1.msra.mxu0 0.0
    %85 = vmatprep.subr.mxu0 0.0
    %86 = vmatpush1.msra.mxu0 0.0
    %87 = vmatprep.subr.mxu0 0.0
    %88 = vmatpush1.msra.mxu0 0.0
    %89 = vmatprep.subr.mxu0 0.0
    %90 = vmatpush1.msra.mxu0 0.0
    %91 = vmatprep.subr.mxu0 0.0
    %92 = vmatpush1.msra.mxu0 0.0
    %93 = vmatprep.subr.mxu0 0.0
    %94 = vmatpush1.msra.mxu0 0.0
    %95 = vmatprep.subr.mxu0 0.0
    %96 = vmatpush1.msra.mxu0 0.0
    %97 = vmatprep.subr.mxu0 0.0
    %98 = vmatpush1.msra.mxu0 0.0
    %99 = vmatprep.subr.mxu0 0.0
    %100 = vmatpush1.msra.mxu0 0.0
    %101 = vmatprep.mubr.f32.mxu0 0.0
    %102 = vmatmul.mubr.f32.gmra.mrb[0].mxu0 %v35
    %v103 = vpop.f32.mrb[0].mxu0
    %v104 = vadd.f32 %v31, %v103
    %v105 = vpop.f32.mrb[0].mxu0
    %106 = vdwg.mxu0
    %v107 = vmax.f32 %v104, 0.0
    %v108 = vld [vmem:[%s3] sm:$0xff]
    %v109 = vld [vmem:[%s3 + $0x8] sm:$0xff]
    %v110 = vld [vmem:[%s3 + $0x10] sm:$0xff]
    %v111 = vld [vmem:[%s3 + $0x18] sm:$0xff]
    %v112 = vld [vmem:[%s3 + $0x20] sm:$0xff]
    %v113 = vld [vmem:[%s3 + $0x28] sm:$0xff]
    %v114 = vld [vmem:[%s3 + $0x30] sm:$0xff]
    %v115 = vld [vmem:[%s3 + $0x38] sm:$0xff]
    %v116 = vld [vmem:[%s3 + $0x40] sm:$0xff]
    %v117 = vld [vmem:[%s3 + $0x48] sm:$0xff]
    %v118 = vld [vmem:[%s3 + $0x50] sm:$0xff]
    %v119 = vld [vmem:[%s3 + $0x58] sm:$0xff]
    %v120 = vld [vmem:[%s3 + $0x60] sm:$0xff]
    %v121 = vld [vmem:[%s3 + $0x68] sm:$0xff]
    %v122 = vld [vmem:[%s3 + $0x70] sm:$0xff]
    %v123 = vld [vmem:[%s3 + $0x78] sm:$0xff]
    %v124 = vld [vmem:[%s4] sm:$0x1]
    %v126 = vlaneseq
    %v127 = vshrl.u32 %v126, 7
    %v128 = vsub.s32 0, %v127
    %v129 = vrot.slane %v124, %v128
    %131 = vmatprep.subr.mxu0 0.0
    %132 = vmatpush1.msra.mxu0 %v108
    %133 = vmatprep.subr.mxu0 0.0
    %134 = vmatpush1.msra.mxu0 %v109
    %135 = vmatprep.subr.mxu0 0.0
    %136 = vmatpush1.msra.mxu0 %v110
    %137 = vmatprep.subr.mxu0 0.0
    %138 = vmatpush1.msra.mxu0 %v111
    %139 = vmatprep.subr.mxu0 0.0
    %140 = vmatpush1.msra.mxu0 %v112
    %141 = vmatprep.subr.mxu0 0.0
    %142 = vmatpush1.msra.mxu0 %v113
    %143 = vmatprep.subr.mxu0 0.0
    %144 = vmatpush1.msra.mxu0 %v114
    %145 = vmatprep.subr.mxu0 0.0
    %146 = vmatpush1.msra.mxu0 %v115
    %147 = vmatprep.subr.mxu0 0.0
    %148 = vmatpush1.msra.mxu0 %v116
    %149 = vmatprep.subr.mxu0 0.0
    %150 = vmatpush1.msra.mxu0 %v117
    %151 = vmatprep.subr.mxu0 0.0
    %152 = vmatpush1.msra.mxu0 %v118
    %153 = vmatprep.subr.mxu0 0.0
    %154 = vmatpush1.msra.mxu0 %v119
    %155 = vmatprep.subr.mxu0 0.0
    %156 = vmatpush1.msra.mxu0 %v120
    %157 = vmatprep.subr.mxu0 0.0
    %158 = vmatpush1.msra.mxu0 %v121
    %159 = vmatprep.subr.mxu0 0.0
    %160 = vmatpush1.msra.mxu0 %v122
    %161 = vmatprep.subr.mxu0 0.0
    %162 = vmatpush1.msra.mxu0 %v123
    %163 = vmatprep.subr.mxu0 0.0
    %164 = vmatpush1.msra.mxu0 0.0
    %165 = vmatprep.subr.mxu0 0.0
    %166 = vmatpush1.msra.mxu0 0.0
    %167 = vmatprep.subr.mxu0 0.0
    %168 = vmatpush1.msra.mxu0 0.0
    %169 = vmatprep.subr.mxu0 0.0
    %170 = vmatpush1.msra.mxu0 0.0
    %171 = vmatprep.subr.mxu0 0.0
    %172 = vmatpush1.msra.mxu0 0.0
    %173 = vmatprep.subr.mxu0 0.0
    %174 = vmatpush1.msra.mxu0 0.0
    %175 = vmatprep.subr.mxu0 0.0
    %176 = vmatpush1.msra.mxu0 0.0
    %177 = vmatprep.subr.mxu0 0.0
    %178 = vmatpush1.msra.mxu0 0.0
    %179 = vmatprep.subr.mxu0 0.0
    %180 = vmatpush1.msra.mxu0 0.0
    %181 = vmatprep.subr.mxu0 0.0
    %182 = vmatpush1.msra.mxu0 0.0
    %183 = vmatprep.subr.mxu0 0.0
    %184 = vmatpush1.msra.mxu0 0.0
    %185 = vmatprep.subr.mxu0 0.0
    %186 = vmatpush1.msra.mxu0 0.0
    %187 = vmatprep.subr.mxu0 0.0
    %188 = vmatpush1.msra.mxu0 0.0
    %189 = vmatprep.subr.mxu0 0.0
    %190 = vmatpush1.msra.mxu0 0.0
    %191 = vmatprep.subr.mxu0 0.0
    %192 = vmatpush1.msra.mxu0 0.0
    %193 = vmatprep.subr.mxu0 0.0
    %194 = vmatpush1.msra.mxu0 0.0
    %195 = vmatprep.mubr.f32.mxu0 0.0
    %196 = vmatmul.mubr.f32.gmra.mrb[0].mxu0 %v107
    %v197 = vpop.f32.mrb[0].mxu0
    %v198 = vadd.f32 %v129, %v197
    %v199 = vpop.f32.mrb[0].mxu0
    %200 = vdwg.mxu0
    %v201 = vmax.f32 %v198, 0.0
    %vm202 = vcmask 130048
    %203 = vst.msk [vmem:[#allocation2] sm:$0xff] %vm202, %v201
    // Predicated region
    $region22: #{tpu_custom_call.1} parent=1 // pred_check
      _
    $region23: #{tpu_custom_call.1} parent=1 // pred_check_branch
      %205 = sbr.rel (0) target = $region25
    $region24: #{tpu_custom_call.1} parent=1 // pred_region
      %s207 = ssub.s32 128, 128
      %208 = vsyncadd [#allocation3], %s207
      %s210 = sshll.u32 [#allocation2], 4
      %s211 = int_to_ptr.vmem [resolvable:$true] %s210
      %213 = dma.vmem_to_hbm [thread:$0]  %s211, 128, %s5, [#allocation3]
    $region25: #{tpu_custom_call.1} parent=1 // pred_fallthru
      _
    // Predicated region
    $region26: #{tpu_custom_call.1} parent=1 // pred_check
      _
    $region27: #{tpu_custom_call.1} parent=1 // pred_check_branch
      %215 = sbr.rel (0) target = $region29
    $region28: #{tpu_custom_call.1} parent=1 // pred_region
      %216 = dma.done [#allocation3], 128
    $region29: #{tpu_custom_call.1} parent=1 // pred_fallthru
      _
    %217 = vsyncpa [#allocation3], 1

</llo_original>
